<compile_context>
chip_gen: v6e
topology: v6e:2x2x1
jax: 0.10.0
libtpu: 0.0.40
codegen_flags: <defaults>
</compile_context>

<pallas_src>
import jax
import jax.numpy as jnp
from jax.experimental import pallas as pl
from jax.experimental.pallas import tpu as pltpu

LANE = 128  # TPU vreg lane width


def _round_up(x, m):
    return ((x + m - 1) // m) * m


def mlp_kernel(x_ref, w1_ref, b1_ref, w2_ref, b2_ref, w3_ref, b3_ref, o_ref):
    # Layer 1: Linear + ReLU.  x is already bf16; MXU accumulates in f32,
    # bias add / ReLU happen in f32 on the VPU.
    h1 = jnp.dot(x_ref[...], w1_ref[...], preferred_element_type=jnp.float32)
    h1 = jnp.maximum(h1 + b1_ref[...], 0.0)

    # Layer 2: Linear + ReLU.
    h2 = jnp.dot(h1.astype(jnp.bfloat16), w2_ref[...],
                 preferred_element_type=jnp.float32)
    h2 = jnp.maximum(h2 + b2_ref[...], 0.0)

    # Layer 3: Linear (logits, no activation).  N = num_classes (un-padded).
    out = jnp.dot(h2.astype(jnp.bfloat16), w3_ref[...],
                  preferred_element_type=jnp.float32)
    o_ref[...] = (out + b3_ref[...]).astype(o_ref.dtype)


def prepare_params(w1, b1, w2, b2, w3, b3):
    """One-time padding / bf16 conversion of the weights (hoisted out of the
    per-call hot path).  Hidden dim is zero-padded to a lane multiple so the
    intermediates are lane-dense; padded columns/rows are zero so results on
    the real slice are unchanged.

    w1: (D_in, H), b1: (1, H) or (H,)
    w2: (H, H),    b2: (1, H) or (H,)
    w3: (H, C),    b3: (1, C) or (C,)
    """
    D_in, H = w1.shape
    C = w3.shape[1]
    H_pad = _round_up(H, LANE)
    bf16 = jnp.bfloat16
    f32 = jnp.float32

    w1_p = jnp.zeros((D_in, H_pad), bf16).at[:, :H].set(w1.astype(bf16))
    w2_p = jnp.zeros((H_pad, H_pad), bf16).at[:H, :H].set(w2.astype(bf16))
    w3_p = jnp.zeros((H_pad, C), bf16).at[:H, :].set(w3.astype(bf16))
    b1_p = jnp.zeros((1, H_pad), f32).at[:, :H].set(b1.astype(f32).reshape(1, H))
    b2_p = jnp.zeros((1, H_pad), f32).at[:, :H].set(b2.astype(f32).reshape(1, H))
    b3_p = b3.astype(f32).reshape(1, C)
    return (w1_p, b1_p, w2_p, b2_p, w3_p, b3_p)


def rede_neural_forward(x, prepared_params, *, block_b=None):
    """Fused Pallas forward pass of the 3-layer MLP.

    x               : (B, D_in) float array
    prepared_params : output of prepare_params()
    Returns (B, C) float32.
    """
    w1_p, b1_p, w2_p, b2_p, w3_p, b3_p = prepared_params
    B, D_in = x.shape
    assert w1_p.shape[0] == D_in, "x feature dim does not match W1"
    H_pad = w1_p.shape[1]
    C = w3_p.shape[1]

    # --- batch tile selection --------------------------------------------
    # Fewest grid steps with tiles <= 2048 rows: large tiles amortize the
    # ~0.35 us per-step overhead; large B still yields several "parallel"
    # steps, which v7x's two TensorCores shard automatically.  Single-TC
    # parts (v5e/v6e) just get one big, DMA-amortized tile for mid-size B.
    if block_b is None:
        max_tile = 2048
        n_steps = pl.cdiv(B, max_tile)
        block_b = max(8, _round_up(pl.cdiv(B, n_steps), 8))
    grid_b = pl.cdiv(B, block_b)
    B_pad = grid_b * block_b

    # --- x: cast to bf16, batch-pad only if needed (no feature padding) ----
    x_b = x.astype(jnp.bfloat16)
    if B_pad != B:
        x_b = jnp.zeros((B_pad, D_in), jnp.bfloat16).at[:B, :].set(x_b)

    # --- cost estimate (lets XLA overlap surrounding ops with the kernel) --
    flops = 2 * B_pad * (D_in * H_pad + H_pad * H_pad + H_pad * C)
    bytes_accessed = (
        B_pad * D_in * 2                                   # x (bf16)
        + (w1_p.size + w2_p.size + w3_p.size) * 2          # weights (bf16)
        + (b1_p.size + b2_p.size + b3_p.size) * 4          # biases (f32)
        + B_pad * C * 4                                    # output (f32)
    )
    cost = pl.CostEstimate(flops=int(flops), transcendentals=0,
                           bytes_accessed=int(bytes_accessed))

    out = pl.pallas_call(
        mlp_kernel,
        out_shape=jax.ShapeDtypeStruct((B_pad, C), jnp.float32),
        grid=(grid_b,),
        in_specs=[
            # x tile: last dim == full array dim, so no 128-multiple needed.
            pl.BlockSpec((block_b, D_in), lambda i: (i, 0)),
            pl.BlockSpec((D_in, H_pad), lambda i: (0, 0)),   # W1 (resident)
            pl.BlockSpec((1, H_pad), lambda i: (0, 0)),      # b1
            pl.BlockSpec((H_pad, H_pad), lambda i: (0, 0)),  # W2 (resident)
            pl.BlockSpec((1, H_pad), lambda i: (0, 0)),      # b2
            pl.BlockSpec((H_pad, C), lambda i: (0, 0)),      # W3 (resident)
            pl.BlockSpec((1, C), lambda i: (0, 0)),          # b3
        ],
        # Output written with the real (un-padded) class dim: far fewer HBM
        # bytes than a 128-padded slab; masked stores are cheap at this size.
        out_specs=pl.BlockSpec((block_b, C), lambda i: (i, 0)),
        compiler_params=pltpu.CompilerParams(
            dimension_semantics=("parallel",)),
        cost_estimate=cost,
    )(x_b, w1_p, b1_p, w2_p, b2_p, w3_p, b3_p)

    return out[:B] if B_pad != B else out


def init_params(key, d_in, d_hidden, n_classes):
    """Deterministic parameter init mimicking nn.Linear's uniform init bounds."""
    ks = jax.random.split(key, 6)

    def lin_init(kw, kb, fan_in, fan_out):
        bound = 1.0 / jnp.sqrt(jnp.float32(fan_in))
        w = jax.random.uniform(kw, (fan_in, fan_out), jnp.float32, -bound, bound)
        b = jax.random.uniform(kb, (1, fan_out), jnp.float32, -bound, bound)
        return w, b

    w1, b1 = lin_init(ks[0], ks[1], d_in, d_hidden)
    w2, b2 = lin_init(ks[2], ks[3], d_hidden, d_hidden)
    w3, b3 = lin_init(ks[4], ks[5], d_hidden, n_classes)
    return w1, b1, w2, b2, w3, b3


def reference_forward(x, w1, b1, w2, b2, w3, b3):
    h1 = jnp.maximum(x @ w1 + b1, 0.0)
    h2 = jnp.maximum(h1 @ w2 + b2, 0.0)
    return h2 @ w3 + b3


if __name__ == "__main__":
    key = jax.random.PRNGKey(0)
    k_x, k_p = jax.random.split(key)

    batch = 8
    tamanho_entrada = 32
    tamanho_oculto = 32
    num_classes = 10

    x = jax.random.normal(k_x, (batch, tamanho_entrada), jnp.float32)
    raw_params = init_params(k_p, tamanho_entrada, tamanho_oculto, num_classes)

    # One-time weight padding / bf16 conversion (hoisted out of the hot path).
    prepared = prepare_params(*raw_params)

    fwd = jax.jit(rede_neural_forward)
    out = fwd(x, prepared)
    out = jax.block_until_ready(out)

    ref = reference_forward(x, *raw_params)
    assert out.shape == (batch, num_classes)
    # bf16 matmul operands with f32 accumulation -> compare with a looser
    # tolerance against the pure-f32 reference.
    assert jnp.allclose(out, ref, atol=5e-2, rtol=5e-2), "mismatch vs reference"

    print("KERNEL_OK")
</pallas_src>

<mosaic_0001>
module attributes {stable_mosaic.version = 11 : i64} {
  func.func @mlp_kernel(%arg0: i32, %arg1: memref<8x32xbf16, #tpu.memory_space<vmem>>, %arg2: memref<32x128xbf16, #tpu.memory_space<vmem>>, %arg3: memref<1x128xf32, #tpu.memory_space<vmem>>, %arg4: memref<128x128xbf16, #tpu.memory_space<vmem>>, %arg5: memref<1x128xf32, #tpu.memory_space<vmem>>, %arg6: memref<128x10xbf16, #tpu.memory_space<vmem>>, %arg7: memref<1x10xf32, #tpu.memory_space<vmem>>, %arg8: memref<8x10xf32, #tpu.memory_space<vmem>>) attributes {dimension_semantics = [#tpu.dimension_semantics<parallel>], iteration_bounds = array<i64: 1>, scalar_prefetch = 0 : i64, scratch_operands = 0 : i64, tpu.core_type = #tpu.core_type<tc>, window_params = [{transform_indices = @transform_0, window_bounds = array<i64: 8, 32>}, {pipeline_mode = #tpu.pipeline_mode<synchronous>, transform_indices = @transform_1, window_bounds = array<i64: 32, 128>}, {pipeline_mode = #tpu.pipeline_mode<synchronous>, transform_indices = @transform_2, window_bounds = array<i64: 1, 128>}, {pipeline_mode = #tpu.pipeline_mode<synchronous>, transform_indices = @transform_3, window_bounds = array<i64: 128, 128>}, {pipeline_mode = #tpu.pipeline_mode<synchronous>, transform_indices = @transform_4, window_bounds = array<i64: 1, 128>}, {pipeline_mode = #tpu.pipeline_mode<synchronous>, transform_indices = @transform_5, window_bounds = array<i64: 128, 10>}, {pipeline_mode = #tpu.pipeline_mode<synchronous>, transform_indices = @transform_6, window_bounds = array<i64: 1, 10>}, {transform_indices = @transform_7, window_bounds = array<i64: 8, 10>}]} {
    %c0 = arith.constant 0 : index
    %c0_0 = arith.constant 0 : index
    %0 = vector.load %arg1[%c0, %c0_0] : memref<8x32xbf16, #tpu.memory_space<vmem>>, vector<8x32xbf16>
    %c0_1 = arith.constant 0 : index
    %c0_2 = arith.constant 0 : index
    %1 = vector.load %arg2[%c0_1, %c0_2] : memref<32x128xbf16, #tpu.memory_space<vmem>>, vector<32x128xbf16>
    %cst = arith.constant dense<0.000000e+00> : vector<8x128xf32>
    %2 = tpu.matmul %0, %1, %cst {dimension_numbers = #tpu.dot_dimension_numbers<[1], [0], [0], [1], [0, 0, 1, 1], [], []>} : vector<8x32xbf16>, vector<32x128xbf16>, vector<8x128xf32> -> vector<8x128xf32>
    %c0_3 = arith.constant 0 : index
    %c0_4 = arith.constant 0 : index
    %3 = vector.load %arg3[%c0_3, %c0_4] : memref<1x128xf32, #tpu.memory_space<vmem>>, vector<1x128xf32>
    %4 = vector.broadcast %3 : vector<1x128xf32> to vector<8x128xf32>
    %5 = arith.addf %2, %4 : vector<8x128xf32>
    %cst_5 = arith.constant 0.000000e+00 : f32
    %6 = vector.broadcast %cst_5 : f32 to vector<8x128xf32>
    %7 = arith.maximumf %5, %6 : vector<8x128xf32>
    %8 = arith.truncf %7 : vector<8x128xf32> to vector<8x128xbf16>
    %c0_6 = arith.constant 0 : index
    %c0_7 = arith.constant 0 : index
    %9 = vector.load %arg4[%c0_6, %c0_7] : memref<128x128xbf16, #tpu.memory_space<vmem>>, vector<128x128xbf16>
    %cst_8 = arith.constant dense<0.000000e+00> : vector<8x128xf32>
    %10 = tpu.matmul %8, %9, %cst_8 {dimension_numbers = #tpu.dot_dimension_numbers<[1], [0], [0], [1], [0, 0, 1, 1], [], []>} : vector<8x128xbf16>, vector<128x128xbf16>, vector<8x128xf32> -> vector<8x128xf32>
    %c0_9 = arith.constant 0 : index
    %c0_10 = arith.constant 0 : index
    %11 = vector.load %arg5[%c0_9, %c0_10] : memref<1x128xf32, #tpu.memory_space<vmem>>, vector<1x128xf32>
    %12 = vector.broadcast %11 : vector<1x128xf32> to vector<8x128xf32>
    %13 = arith.addf %10, %12 : vector<8x128xf32>
    %cst_11 = arith.constant 0.000000e+00 : f32
    %14 = vector.broadcast %cst_11 : f32 to vector<8x128xf32>
    %15 = arith.maximumf %13, %14 : vector<8x128xf32>
    %16 = arith.truncf %15 : vector<8x128xf32> to vector<8x128xbf16>
    %c0_12 = arith.constant 0 : index
    %c0_13 = arith.constant 0 : index
    %17 = vector.load %arg6[%c0_12, %c0_13] : memref<128x10xbf16, #tpu.memory_space<vmem>>, vector<128x10xbf16>
    %cst_14 = arith.constant dense<0.000000e+00> : vector<8x10xf32>
    %18 = tpu.matmul %16, %17, %cst_14 {dimension_numbers = #tpu.dot_dimension_numbers<[1], [0], [0], [1], [0, 0, 1, 1], [], []>} : vector<8x128xbf16>, vector<128x10xbf16>, vector<8x10xf32> -> vector<8x10xf32>
    %c0_15 = arith.constant 0 : index
    %c0_16 = arith.constant 0 : index
    %19 = vector.load %arg7[%c0_15, %c0_16] : memref<1x10xf32, #tpu.memory_space<vmem>>, vector<1x10xf32>
    %20 = vector.broadcast %19 : vector<1x10xf32> to vector<8x10xf32>
    %21 = arith.addf %18, %20 : vector<8x10xf32>
    %c0_17 = arith.constant 0 : index
    %c0_18 = arith.constant 0 : index
    %22 = vector.load %arg8[%c0_17, %c0_18] : memref<8x10xf32, #tpu.memory_space<vmem>>, vector<8x10xf32>
    tpu.vector_store %arg8[%c0_17, %c0_18], %21 {strides = array<i32>} : memref<8x10xf32, #tpu.memory_space<vmem>>, vector<8x10xf32>,
    return
  }
  func.func @transform_0(%arg0: i32) -> (i32, i32) {
    %c0_i32 = arith.constant 0 : i32
    %c0_i32_0 = arith.constant 0 : i32
    return %arg0, %c0_i32 : i32, i32
  }
  func.func @transform_1(%arg0: i32) -> (i32, i32) {
    %c0_i32 = arith.constant 0 : i32
    %c0_i32_0 = arith.constant 0 : i32
    %c0_i32_1 = arith.constant 0 : i32
    return %c0_i32, %c0_i32_0 : i32, i32
  }
  func.func @transform_2(%arg0: i32) -> (i32, i32) {
    %c0_i32 = arith.constant 0 : i32
    %c0_i32_0 = arith.constant 0 : i32
    %c0_i32_1 = arith.constant 0 : i32
    return %c0_i32, %c0_i32_0 : i32, i32
  }
  func.func @transform_3(%arg0: i32) -> (i32, i32) {
    %c0_i32 = arith.constant 0 : i32
    %c0_i32_0 = arith.constant 0 : i32
    %c0_i32_1 = arith.constant 0 : i32
    return %c0_i32, %c0_i32_0 : i32, i32
  }
  func.func @transform_4(%arg0: i32) -> (i32, i32) {
    %c0_i32 = arith.constant 0 : i32
    %c0_i32_0 = arith.constant 0 : i32
    %c0_i32_1 = arith.constant 0 : i32
    return %c0_i32, %c0_i32_0 : i32, i32
  }
  func.func @transform_5(%arg0: i32) -> (i32, i32) {
    %c0_i32 = arith.constant 0 : i32
    %c0_i32_0 = arith.constant 0 : i32
    %c0_i32_1 = arith.constant 0 : i32
    return %c0_i32, %c0_i32_0 : i32, i32
  }
  func.func @transform_6(%arg0: i32) -> (i32, i32) {
    %c0_i32 = arith.constant 0 : i32
    %c0_i32_0 = arith.constant 0 : i32
    %c0_i32_1 = arith.constant 0 : i32
    return %c0_i32, %c0_i32_0 : i32, i32
  }
  func.func @transform_7(%arg0: i32) -> (i32, i32) {
    %c0_i32 = arith.constant 0 : i32
    %c0_i32_0 = arith.constant 0 : i32
    return %arg0, %c0_i32 : i32, i32
  }
}

</mosaic_0001>

<llo_original>
// kernel: rede_neural_forward.1
$region0: #{rede_neural_forward.1}
  #allocation0 [shape = 'u32[]', space=smem, size = 0x4, offset = 0x4, fixed_abs, tag = 'smem constant byte address 0x4 - core index']
  #allocation1 [shape = 'u32[144,128]{1,0:T(1,128)}', space=vmem, size = 0x12000, scoped, tag = 'internal scratch']
  %s0 = inlined_call_operand.vmem [shape: bf16[8,32], index: 0, kind: input, shape index: {}]
  %s1 = inlined_call_operand.vmem [shape: bf16[32,128], index: 1, kind: input, shape index: {}]
  %s2 = inlined_call_operand.vmem [shape: f32[1,128], index: 2, kind: input, shape index: {}]
  %s3 = inlined_call_operand.vmem [shape: bf16[128,128], index: 3, kind: input, shape index: {}]
  %s4 = inlined_call_operand.vmem [shape: f32[1,128], index: 4, kind: input, shape index: {}]
  %s5 = inlined_call_operand.vmem [shape: bf16[128,10], index: 5, kind: input, shape index: {}]
  %s6 = inlined_call_operand.vmem [shape: f32[1,10], index: 6, kind: input, shape index: {}]
  %s7 = inlined_call_operand.hbm [shape: f32[8,10], index: 7, kind: output, shape index: {}]
  %s8 = sld [smem:[#allocation0]]
  $region38: #{rede_neural_forward.1} parent=0
    _
  %s10 = ssub.s32 1, %s8
  %s11 = scalar_select 0, %s10, %s8
  $region1: #{rede_neural_forward.1} parent=0
    #allocation2 [shape = 'u8[4096]{0}', space=vmem, size = 0x1000, scoped, tag = 'output window, operand 0, single buffered']
    #allocation3 [shape = 's32[1]{0}', space=sflag, size = 0x4, scoped, tag = 'scoped memory for rede_neural_forward.1']
    %12 = vsyncpa [#allocation3], 0
    // Predicated region
    $region2: #{rede_neural_forward.1} parent=1 // pred_check
      _
    $region3: #{rede_neural_forward.1} parent=1 // pred_check_branch
      %14 = sbr.rel (0) target = $region5
    $region4: #{rede_neural_forward.1} parent=1 // pred_region
      _
    $region5: #{rede_neural_forward.1} parent=1 // pred_fallthru
      _
    // Predicated region
    $region6: #{rede_neural_forward.1} parent=1 // pred_check
      _
    $region7: #{rede_neural_forward.1} parent=1 // pred_check_branch
      %16 = sbr.rel (0) target = $region9
    $region8: #{rede_neural_forward.1} parent=1 // pred_region
      _
    $region9: #{rede_neural_forward.1} parent=1 // pred_fallthru
      _
    // Predicated region
    $region10: #{rede_neural_forward.1} parent=1 // pred_check
      _
    $region11: #{rede_neural_forward.1} parent=1 // pred_check_branch
      %18 = sbr.rel (0) target = $region13
    $region12: #{rede_neural_forward.1} parent=1 // pred_region
      _
    $region13: #{rede_neural_forward.1} parent=1 // pred_fallthru
      _
    // Predicated region
    $region14: #{rede_neural_forward.1} parent=1 // pred_check
      _
    $region15: #{rede_neural_forward.1} parent=1 // pred_check_branch
      %20 = sbr.rel (0) target = $region17
    $region16: #{rede_neural_forward.1} parent=1 // pred_region
      _
    $region17: #{rede_neural_forward.1} parent=1 // pred_fallthru
      _
    // Predicated region
    $region18: #{rede_neural_forward.1} parent=1 // pred_check
      _
    $region19: #{rede_neural_forward.1} parent=1 // pred_check_branch
      %22 = sbr.rel (0) target = $region21
    $region20: #{rede_neural_forward.1} parent=1 // pred_region
      _
    $region21: #{rede_neural_forward.1} parent=1 // pred_fallthru
      _
    // Predicated region
    $region22: #{rede_neural_forward.1} parent=1 // pred_check
      _
    $region23: #{rede_neural_forward.1} parent=1 // pred_check_branch
      %24 = sbr.rel (0) target = $region25
    $region24: #{rede_neural_forward.1} parent=1 // pred_region
      _
    $region25: #{rede_neural_forward.1} parent=1 // pred_fallthru
      _
    // Predicated region
    $region26: #{rede_neural_forward.1} parent=1 // pred_check
      _
    $region27: #{rede_neural_forward.1} parent=1 // pred_check_branch
      %26 = sbr.rel (0) target = $region29
    $region28: #{rede_neural_forward.1} parent=1 // pred_region
      _
    $region29: #{rede_neural_forward.1} parent=1 // pred_fallthru
      _
    %v28 = vld [vmem:[%s0] sm:$0xf]
    %v29 = vld [vmem:[%s1] sm:$0xf]
    %v30 = vld [vmem:[%s1 + $0x4] sm:$0xf]
    %v31 = vld [vmem:[%s1 + $0x8] sm:$0xf]
    %v32 = vld [vmem:[%s1 + $0xc] sm:$0xf]
    %v33 = vld [vmem:[%s2] sm:$0x1]
    %v35 = vlaneseq
    %v36 = vshrl.u32 %v35, 7
    %v37 = vsub.s32 0, %v36
    %v38 = vrot.slane %v33, %v37
    %v44 = vunpack.c.l.b16 %v29
    %v45 = vunpack.c.l.b16 %v30
    %v46 = vunpack.c.l.b16 %v31
    %v47 = vunpack.c.l.b16 %v32
    %v48 = vpack.c.b16 %v45, %v44
    %v49 = vpack.c.b16 %v47, %v46
    %vm52 = vcmask 261120
    %v54 = vsel %vm52, %v28, 0
    %56 = vmatprep.subr.bf16.mxu0 0
    %57 = vmatpush1.bf16.msra.mxu0 0
    %58 = vmatprep.subr.bf16.mxu0 0
    %59 = vmatpush1.bf16.msra.mxu0 0
    %60 = vmatprep.subr.bf16.mxu0 0
    %61 = vmatpush1.bf16.msra.mxu0 0
    %62 = vmatprep.subr.bf16.mxu0 0
    %63 = vmatpush1.bf16.msra.mxu0 0
    %64 = vmatprep.subr.bf16.mxu0 0
    %65 = vmatpush1.bf16.msra.mxu0 0
    %66 = vmatprep.subr.bf16.mxu0 0
    %67 = vmatpush1.bf16.msra.mxu0 0
    %68 = vmatprep.subr.bf16.mxu0 0
    %69 = vmatpush1.bf16.msra.mxu0 %v49
    %70 = vmatprep.subr.bf16.mxu0 0
    %71 = vmatpush1.bf16.msra.mxu0 %v48
    %72 = vmatprep.subr.bf16.mxu0 0
    %73 = vmatpush2.bf16.msra.mxu0 0
    %74 = vmatprep.subr.bf16.mxu0 0
    %75 = vmatpush2.bf16.msra.mxu0 0
    %76 = vmatprep.subr.bf16.mxu0 0
    %77 = vmatpush2.bf16.msra.mxu0 0
    %78 = vmatprep.subr.bf16.mxu0 0
    %79 = vmatpush2.bf16.msra.mxu0 0
    %80 = vmatprep.subr.bf16.mxu0 0
    %81 = vmatpush2.bf16.msra.mxu0 0
    %82 = vmatprep.subr.bf16.mxu0 0
    %83 = vmatpush2.bf16.msra.mxu0 0
    %84 = vmatprep.subr.bf16.mxu0 0
    %85 = vmatpush2.bf16.msra.mxu0 0
    %86 = vmatprep.subr.bf16.mxu0 0
    %87 = vmatpush2.bf16.msra.mxu0 0
    %88 = vmatprep.mubr.bf16.mxu0 0
    %89 = vmatmul.mubr.bf16.gmra.mxu0 %v54
    %v90 = vpop.f32.mrf.mxu0
    %v91 = vadd.f32 %v38, %v90
    %v92 = vpop.f32.mrf.mxu0
    %v93 = vpop.f32.mrf.mxu0
    %v94 = vpop.f32.mrf.mxu0
    %95 = vdwg.mxu0
    %v96 = vmax.f32 %v91, 0.0
    %v97 = vpack.c.bf16 %v96, %v96
    %v98 = vld [vmem:[%s3] sm:$0xf]
    %v99 = vld [vmem:[%s3 + $0x4] sm:$0xf]
    %v100 = vld [vmem:[%s3 + $0x8] sm:$0xf]
    %v101 = vld [vmem:[%s3 + $0xc] sm:$0xf]
    %v102 = vld [vmem:[%s3 + $0x10] sm:$0xf]
    %v103 = vld [vmem:[%s3 + $0x14] sm:$0xf]
    %v104 = vld [vmem:[%s3 + $0x18] sm:$0xf]
    %v105 = vld [vmem:[%s3 + $0x1c] sm:$0xf]
    %v106 = vld [vmem:[%s3 + $0x20] sm:$0xf]
    %v107 = vld [vmem:[%s3 + $0x24] sm:$0xf]
    %v108 = vld [vmem:[%s3 + $0x28] sm:$0xf]
    %v109 = vld [vmem:[%s3 + $0x2c] sm:$0xf]
    %v110 = vld [vmem:[%s3 + $0x30] sm:$0xf]
    %v111 = vld [vmem:[%s3 + $0x34] sm:$0xf]
    %v112 = vld [vmem:[%s3 + $0x38] sm:$0xf]
    %v113 = vld [vmem:[%s3 + $0x3c] sm:$0xf]
    %v114 = vld [vmem:[%s4] sm:$0x1]
    %v116 = vlaneseq
    %v117 = vshrl.u32 %v116, 7
    %v118 = vsub.s32 0, %v117
    %v119 = vrot.slane %v114, %v118
    %v137 = vunpack.c.l.b16 %v98
    %v138 = vunpack.c.l.b16 %v99
    %v139 = vunpack.c.l.b16 %v100
    %v140 = vunpack.c.l.b16 %v101
    %v141 = vunpack.c.l.b16 %v102
    %v142 = vunpack.c.l.b16 %v103
    %v143 = vunpack.c.l.b16 %v104
    %v144 = vunpack.c.l.b16 %v105
    %v145 = vunpack.c.l.b16 %v106
    %v146 = vunpack.c.l.b16 %v107
    %v147 = vunpack.c.l.b16 %v108
    %v148 = vunpack.c.l.b16 %v109
    %v149 = vunpack.c.l.b16 %v110
    %v150 = vunpack.c.l.b16 %v111
    %v151 = vunpack.c.l.b16 %v112
    %v152 = vunpack.c.l.b16 %v113
    %v153 = vpack.c.b16 %v138, %v137
    %v154 = vpack.c.b16 %v140, %v139
    %v155 = vpack.c.b16 %v142, %v141
    %v156 = vpack.c.b16 %v144, %v143
    %v157 = vpack.c.b16 %v146, %v145
    %v158 = vpack.c.b16 %v148, %v147
    %v159 = vpack.c.b16 %v150, %v149
    %v160 = vpack.c.b16 %v152, %v151
    %169 = vmatprep.subr.bf16.mxu0 0
    %170 = vmatpush1.bf16.msra.mxu0 %v160
    %171 = vmatprep.subr.bf16.mxu0 0
    %172 = vmatpush1.bf16.msra.mxu0 %v159
    %173 = vmatprep.subr.bf16.mxu0 0
    %174 = vmatpush1.bf16.msra.mxu0 %v158
    %175 = vmatprep.subr.bf16.mxu0 0
    %176 = vmatpush1.bf16.msra.mxu0 %v157
    %177 = vmatprep.subr.bf16.mxu0 0
    %178 = vmatpush1.bf16.msra.mxu0 %v156
    %179 = vmatprep.subr.bf16.mxu0 0
    %180 = vmatpush1.bf16.msra.mxu0 %v155
    %181 = vmatprep.subr.bf16.mxu0 0
    %182 = vmatpush1.bf16.msra.mxu0 %v154
    %183 = vmatprep.subr.bf16.mxu0 0
    %184 = vmatpush1.bf16.msra.mxu0 %v153
    %185 = vmatprep.subr.bf16.mxu0 0
    %186 = vmatpush2.bf16.msra.mxu0 0
    %187 = vmatprep.subr.bf16.mxu0 0
    %188 = vmatpush2.bf16.msra.mxu0 0
    %189 = vmatprep.subr.bf16.mxu0 0
    %190 = vmatpush2.bf16.msra.mxu0 0
    %191 = vmatprep.subr.bf16.mxu0 0
    %192 = vmatpush2.bf16.msra.mxu0 0
    %193 = vmatprep.subr.bf16.mxu0 0
    %194 = vmatpush2.bf16.msra.mxu0 0
    %195 = vmatprep.subr.bf16.mxu0 0
    %196 = vmatpush2.bf16.msra.mxu0 0
    %197 = vmatprep.subr.bf16.mxu0 0
    %198 = vmatpush2.bf16.msra.mxu0 0
    %199 = vmatprep.subr.bf16.mxu0 0
    %200 = vmatpush2.bf16.msra.mxu0 0
    %201 = vmatprep.mubr.bf16.mxu0 0
    %202 = vmatmul.mubr.bf16.gmra.mxu0 %v97
    %v203 = vpop.f32.mrf.mxu0
    %v204 = vadd.f32 %v119, %v203
    %v205 = vpop.f32.mrf.mxu0
    %v206 = vpop.f32.mrf.mxu0
    %v207 = vpop.f32.mrf.mxu0
    %208 = vdwg.mxu0
    %v209 = vmax.f32 %v204, 0.0
    %v210 = vpack.c.bf16 %v209, %v209
    %v211 = vld [vmem:[%s5] sm:$0xf]
    %v212 = vld [vmem:[%s5 + $0x4] sm:$0xf]
    %v213 = vld [vmem:[%s5 + $0x8] sm:$0xf]
    %v214 = vld [vmem:[%s5 + $0xc] sm:$0xf]
    %v215 = vld [vmem:[%s5 + $0x10] sm:$0xf]
    %v216 = vld [vmem:[%s5 + $0x14] sm:$0xf]
    %v217 = vld [vmem:[%s5 + $0x18] sm:$0xf]
    %v218 = vld [vmem:[%s5 + $0x1c] sm:$0xf]
    %v219 = vld [vmem:[%s5 + $0x20] sm:$0xf]
    %v220 = vld [vmem:[%s5 + $0x24] sm:$0xf]
    %v221 = vld [vmem:[%s5 + $0x28] sm:$0xf]
    %v222 = vld [vmem:[%s5 + $0x2c] sm:$0xf]
    %v223 = vld [vmem:[%s5 + $0x30] sm:$0xf]
    %v224 = vld [vmem:[%s5 + $0x34] sm:$0xf]
    %v225 = vld [vmem:[%s5 + $0x38] sm:$0xf]
    %v226 = vld [vmem:[%s5 + $0x3c] sm:$0xf]
    %v227 = vld [vmem:[%s6] sm:$0x1]
    %v229 = vlaneseq
    %v230 = vshrl.u32 %v229, 7
    %v231 = vsub.s32 0, %v230
    %v232 = vrot.slane %v227, %v231
    %v250 = vunpack.c.l.b16 %v211
    %v251 = vunpack.c.l.b16 %v212
    %v252 = vunpack.c.l.b16 %v213
    %v253 = vunpack.c.l.b16 %v214
    %v254 = vunpack.c.l.b16 %v215
    %v255 = vunpack.c.l.b16 %v216
    %v256 = vunpack.c.l.b16 %v217
    %v257 = vunpack.c.l.b16 %v218
    %v258 = vunpack.c.l.b16 %v219
    %v259 = vunpack.c.l.b16 %v220
    %v260 = vunpack.c.l.b16 %v221
    %v261 = vunpack.c.l.b16 %v222
    %v262 = vunpack.c.l.b16 %v223
    %v263 = vunpack.c.l.b16 %v224
    %v264 = vunpack.c.l.b16 %v225
    %v265 = vunpack.c.l.b16 %v226
    %v266 = vpack.c.b16 %v251, %v250
    %v267 = vpack.c.b16 %v253, %v252
    %v268 = vpack.c.b16 %v255, %v254
    %v269 = vpack.c.b16 %v257, %v256
    %v270 = vpack.c.b16 %v259, %v258
    %v271 = vpack.c.b16 %v261, %v260
    %v272 = vpack.c.b16 %v263, %v262
    %v273 = vpack.c.b16 %v265, %v264
    %282 = vmatprep.subr.bf16.mxu0 0
    %283 = vmatpush1.bf16.msra.mxu0 %v273
    %284 = vmatprep.subr.bf16.mxu0 0
    %285 = vmatpush1.bf16.msra.mxu0 %v272
    %286 = vmatprep.subr.bf16.mxu0 0
    %287 = vmatpush1.bf16.msra.mxu0 %v271
    %288 = vmatprep.subr.bf16.mxu0 0
    %289 = vmatpush1.bf16.msra.mxu0 %v270
    %290 = vmatprep.subr.bf16.mxu0 0
    %291 = vmatpush1.bf16.msra.mxu0 %v269
    %292 = vmatprep.subr.bf16.mxu0 0
    %293 = vmatpush1.bf16.msra.mxu0 %v268
    %294 = vmatprep.subr.bf16.mxu0 0
    %295 = vmatpush1.bf16.msra.mxu0 %v267
    %296 = vmatprep.subr.bf16.mxu0 0
    %297 = vmatpush1.bf16.msra.mxu0 %v266
    %298 = vmatprep.subr.bf16.mxu0 0
    %299 = vmatpush2.bf16.msra.mxu0 0
    %300 = vmatprep.subr.bf16.mxu0 0
    %301 = vmatpush2.bf16.msra.mxu0 0
    %302 = vmatprep.subr.bf16.mxu0 0
    %303 = vmatpush2.bf16.msra.mxu0 0
    %304 = vmatprep.subr.bf16.mxu0 0
    %305 = vmatpush2.bf16.msra.mxu0 0
    %306 = vmatprep.subr.bf16.mxu0 0
    %307 = vmatpush2.bf16.msra.mxu0 0
    %308 = vmatprep.subr.bf16.mxu0 0
    %309 = vmatpush2.bf16.msra.mxu0 0
    %310 = vmatprep.subr.bf16.mxu0 0
    %311 = vmatpush2.bf16.msra.mxu0 0
    %312 = vmatprep.subr.bf16.mxu0 0
    %313 = vmatpush2.bf16.msra.mxu0 0
    %314 = vmatprep.mubr.bf16.mxu0 0
    %315 = vmatmul.mubr.bf16.gmra.mxu0 %v210
    %v316 = vpop.f32.mrf.mxu0
    %v317 = vadd.f32 %v232, %v316
    %v318 = vpop.f32.mrf.mxu0
    %v319 = vpop.f32.mrf.mxu0
    %v320 = vpop.f32.mrf.mxu0
    %321 = vdwg.mxu0
    %vm322 = vcmask 80896
    %323 = vst.msk [vmem:[#allocation2] sm:$0xff] %vm322, %v317
    // Predicated region
    $region30: #{rede_neural_forward.1} parent=1 // pred_check
      _
    $region31: #{rede_neural_forward.1} parent=1 // pred_check_branch
      %325 = sbr.rel (0) target = $region33
    $region32: #{rede_neural_forward.1} parent=1 // pred_region
      %s327 = ssub.s32 128, 128
      %328 = vsyncadd [#allocation3], %s327
      %s330 = sshll.u32 [#allocation2], 4
      %s331 = int_to_ptr.vmem [resolvable:$true] %s330
      %333 = dma.vmem_to_hbm [thread:$0]  %s331, 128, %s7, [#allocation3]
    $region33: #{rede_neural_forward.1} parent=1 // pred_fallthru
      _
    // Predicated region
    $region34: #{rede_neural_forward.1} parent=1 // pred_check
      _
    $region35: #{rede_neural_forward.1} parent=1 // pred_check_branch
      %335 = sbr.rel (0) target = $region37
    $region36: #{rede_neural_forward.1} parent=1 // pred_region
      %336 = dma.done [#allocation3], 128
    $region37: #{rede_neural_forward.1} parent=1 // pred_fallthru
      _
    %337 = vsyncpa [#allocation3], 1

</llo_original>
